<compile_context>
chip_gen: v5e
topology: v5e:2x2
jax: 0.10.0
libtpu: 0.0.40
codegen_flags: <defaults>
</compile_context>

<pallas_src>
import jax
import jax.numpy as jnp
from jax.experimental import pallas as pl
from jax.experimental.pallas import tpu as pltpu


def adamerging_kernel(alph_ref, x_ref, w_stack_ref, b_stack_ref, wh_ref, bh_ref,
                      out_ref, feat_acc_ref):
    # alph_ref     : (P=2, K) f32 in SMEM -- row 0 = lambdas for W, row 1 = lambdas for b
    # x_ref        : (tn, tk)  f32         batch tile x D_in tile (flattened NCHW)
    # w_stack_ref  : (K, tk, D_feat) bf16  per-model encoder weight tile
    # b_stack_ref  : (K, 1, D_feat)  f32   per-model encoder bias (whole array)
    # wh_ref       : (D_feat, C_pad) f32   head weight, pre-transposed + lane-padded
    # bh_ref       : (1, C_pad)      f32   head bias, lane-padded
    # out_ref      : (tn, C_pad)     f32
    # feat_acc_ref : (tn, D_feat)    f32   VMEM scratch accumulator
    r = pl.program_id(1)                      # reduction step over D_in
    K = w_stack_ref.shape[0]

    @pl.when(r == 0)
    def _():
        feat_acc_ref[...] = jnp.zeros_like(feat_acc_ref)

    x_tile = x_ref[...].astype(jnp.bfloat16)  # bf16 MXU operand; f32 accumulate
    acc = feat_acc_ref[...]
    for k in range(K):
        # AdaMerging merge folded into the matmul: scale the small (tn, D_feat)
        # matmul output per model instead of materializing a merged weight matrix.
        acc = acc + alph_ref[0, k] * jnp.dot(
            x_tile, w_stack_ref[k], preferred_element_type=jnp.float32)
    feat_acc_ref[...] = acc

    @pl.when(r == pl.num_programs(1) - 1)
    def _():
        # Merge the encoder bias on the (1, D_feat) output side.
        b_merged = alph_ref[1, 0] * b_stack_ref[0]
        for k in range(1, K):
            b_merged = b_merged + alph_ref[1, k] * b_stack_ref[k]
        feat = feat_acc_ref[...] + b_merged
        # Classification head: RHS pre-transposed so the contraction dim leads
        # (no in-kernel relayout); output lane-padded to 128 -> unmasked store.
        logits = jnp.dot(feat, wh_ref[...],
                         preferred_element_type=jnp.float32) + bh_ref[...]
        out_ref[...] = logits.astype(out_ref.dtype)


def adamerging_forward(alph, x_flat, w_stack, b_stack, wh, bh, *, tk=256):
    N, D_in = x_flat.shape
    K, _, D_feat = w_stack.shape
    num_classes = wh.shape[0]

    SUBLANE, LANE = 8, 128

    # Pad batch to a full f32 sublane group.
    n_pad = ((max(N, SUBLANE) + SUBLANE - 1) // SUBLANE) * SUBLANE
    x_p = jnp.zeros((n_pad, D_in), jnp.float32).at[:N].set(x_flat.astype(jnp.float32))

    # Head: pre-transpose to (D_feat, C) and pad the class dim to a lane-dense 128.
    c_pad = ((max(num_classes, LANE) + LANE - 1) // LANE) * LANE
    wh_t = jnp.zeros((D_feat, c_pad), jnp.float32).at[:, :num_classes].set(
        wh.astype(jnp.float32).T)
    bh_p = jnp.zeros((1, c_pad), jnp.float32).at[:, :num_classes].set(
        bh.astype(jnp.float32).reshape(1, -1))

    # Stream the dominant K-model weight stack as bf16 (half the HBM bytes).
    w_bf16 = w_stack.astype(jnp.bfloat16)
    b_f32 = b_stack.astype(jnp.float32)
    alph = alph.astype(jnp.float32)

    # Reduction tile over D_in.
    tk = min(tk, D_in)
    while D_in % tk != 0:
        tk //= 2
    tn = SUBLANE
    grid = (n_pad // tn, D_in // tk)

    cost = pl.CostEstimate(
        flops=2 * n_pad * D_in * D_feat * K + 2 * n_pad * D_feat * c_pad,
        transcendentals=0,
        bytes_accessed=(w_bf16.size * 2 + x_p.size * 4 + b_f32.size * 4
                        + wh_t.size * 4 + bh_p.size * 4 + n_pad * c_pad * 4),
    )

    out = pl.pallas_call(
        adamerging_kernel,
        out_shape=jax.ShapeDtypeStruct((n_pad, c_pad), jnp.float32),
        grid_spec=pltpu.PrefetchScalarGridSpec(
            num_scalar_prefetch=0,
            grid=grid,
            in_specs=[
                pl.BlockSpec(memory_space=pltpu.MemorySpace.SMEM),        # alph
                pl.BlockSpec((tn, tk), lambda i, r: (i, r)),              # x tile
                pl.BlockSpec((K, tk, D_feat), lambda i, r: (0, r, 0)),    # W stack tile
                pl.BlockSpec(memory_space=pltpu.MemorySpace.VMEM),        # b stack
                pl.BlockSpec(memory_space=pltpu.MemorySpace.VMEM),        # head W^T
                pl.BlockSpec(memory_space=pltpu.MemorySpace.VMEM),        # head b
            ],
            out_specs=pl.BlockSpec((tn, c_pad), lambda i, r: (i, 0)),
            scratch_shapes=[pltpu.VMEM((tn, D_feat), jnp.float32)],
        ),
        compiler_params=pltpu.CompilerParams(
            dimension_semantics=("parallel", "arbitrary"),
            vmem_limit_bytes=32 * 1024 * 1024,     # safe for v7x's 64 MiB VMEM too
        ),
        cost_estimate=cost,
    )(alph, x_p, w_bf16, b_f32, wh_t, bh_p)

    return out[:N, :num_classes]


def compute_lambdas(lambdas_raw):
    """lambdas(): clamp task lambdas to [0,1], prepend pretrain lambdas (=1)."""
    P = lambdas_raw.shape[0]
    pretrain_lambdas = jnp.ones((P, 1), jnp.float32)
    task_lambdas = jnp.clip(lambdas_raw, 0.0, 1.0)
    return jnp.concatenate([pretrain_lambdas, task_lambdas], axis=1)  # (P, K)


if __name__ == "__main__":
    # Small synthetic setup: K models (pretrained + 2 task models), the synthetic
    # image encoder has P = 2 parameters (weight, bias).
    # TODO(synk): real CLIP image encoder + per-dataset classification heads are
    # external checkpoints; replaced with a deterministic linear encoder/head.
    N, C, H, Wd = 2, 4, 16, 16
    D_in = C * H * Wd            # 1024
    D_feat = 128                 # feature dim (lane-dense)
    num_classes = 32
    K = 3                        # number of models being merged
    P = 2                        # number of parameters per model (W, b)

    key = jax.random.PRNGKey(0)
    k1, k2, k3, k4, k5 = jax.random.split(key, 5)
    x = jax.random.normal(k1, (N, C, H, Wd), jnp.float32)
    w_stack = jax.random.normal(k2, (K, D_in, D_feat), jnp.float32) * 0.02
    b_stack = jax.random.normal(k3, (K, 1, D_feat), jnp.float32) * 0.02
    wh = jax.random.normal(k4, (num_classes, D_feat), jnp.float32) * 0.02
    bh = jax.random.normal(k5, (1, num_classes), jnp.float32) * 0.02

    # lambdas_raw initialized with prior = 0.3, exactly as in __init__
    lambdas_raw = jnp.full((P, K - 1), 0.3, jnp.float32)

    alph = compute_lambdas(lambdas_raw)          # (P, K)
    x_flat = x.reshape(N, D_in)                  # NCHW flattened row-major

    out = adamerging_forward(alph, x_flat, w_stack, b_stack, wh, bh)
    out = jax.block_until_ready(out)

    # Pure-JAX reference at matching (bf16 weight/activation, f32 accumulate) precision.
    x_bf = x_flat.astype(jnp.bfloat16).astype(jnp.float32)
    w_bf = w_stack.astype(jnp.bfloat16).astype(jnp.float32)
    feat_ref = jnp.einsum('k,nd,kdf->nf', alph[0], x_bf, w_bf)
    feat_ref = feat_ref + jnp.einsum('k,kif->if', alph[1], b_stack)
    ref = jnp.dot(feat_ref, wh.T, precision=jax.lax.Precision.HIGHEST) + bh

    assert out.shape == (N, num_classes)
    assert jnp.allclose(out, ref, atol=5e-3, rtol=5e-3), "kernel/reference mismatch"

    print("KERNEL_OK")
</pallas_src>

<mosaic_0001>
module attributes {stable_mosaic.version = 11 : i64} {
  func.func @adamerging_kernel(%arg0: i32, %arg1: i32, %arg2: memref<2x3xf32, #tpu.memory_space<smem>>, %arg3: memref<8x256xf32, #tpu.memory_space<vmem>>, %arg4: memref<3x256x128xbf16, #tpu.memory_space<vmem>>, %arg5: memref<3x1x128xf32, #tpu.memory_space<vmem>>, %arg6: memref<128x128xf32, #tpu.memory_space<vmem>>, %arg7: memref<1x128xf32, #tpu.memory_space<vmem>>, %arg8: memref<8x128xf32, #tpu.memory_space<vmem>>, %arg9: memref<8x128xf32, #tpu.memory_space<vmem>>) attributes {dimension_semantics = [#tpu.dimension_semantics<parallel>, #tpu.dimension_semantics<arbitrary>], iteration_bounds = array<i64: 1, 4>, scalar_prefetch = 0 : i64, scratch_operands = 1 : i64, tpu.core_type = #tpu.core_type<tc>, window_params = [{transform_indices = @transform_0, window_bounds = array<i64: 2, 3>}, {transform_indices = @transform_1, window_bounds = array<i64: 8, 256>}, {transform_indices = @transform_2, window_bounds = array<i64: 3, 256, 128>}, {pipeline_mode = #tpu.pipeline_mode<synchronous>, transform_indices = @transform_3, window_bounds = array<i64: 3, 1, 128>}, {pipeline_mode = #tpu.pipeline_mode<synchronous>, transform_indices = @transform_4, window_bounds = array<i64: 128, 128>}, {pipeline_mode = #tpu.pipeline_mode<synchronous>, transform_indices = @transform_5, window_bounds = array<i64: 1, 128>}, {transform_indices = @transform_6, window_bounds = array<i64: 8, 128>}]} {
    %c0_i32 = arith.constant 0 : i32
    %0 = arith.cmpi eq, %arg1, %c0_i32 : i32
    %1 = arith.extui %0 : i1 to i32
    %c0_i32_0 = arith.constant 0 : i32
    %2 = arith.cmpi ne, %1, %c0_i32_0 : i32
    scf.if %2 {
      %cst_22 = arith.constant 0.000000e+00 : f32
      %31 = vector.broadcast %cst_22 : f32 to vector<8x128xf32>
      %c0_23 = arith.constant 0 : index
      %c0_24 = arith.constant 0 : index
      %32 = vector.load %arg9[%c0_23, %c0_24] : memref<8x128xf32, #tpu.memory_space<vmem>>, vector<8x128xf32>
      tpu.vector_store %arg9[%c0_23, %c0_24], %31 {strides = array<i32>} : memref<8x128xf32, #tpu.memory_space<vmem>>, vector<8x128xf32>,
    } else {
    }
    %c0 = arith.constant 0 : index
    %c0_1 = arith.constant 0 : index
    %3 = vector.load %arg3[%c0, %c0_1] : memref<8x256xf32, #tpu.memory_space<vmem>>, vector<8x256xf32>
    %4 = arith.truncf %3 : vector<8x256xf32> to vector<8x256xbf16>
    %c0_2 = arith.constant 0 : index
    %c0_3 = arith.constant 0 : index
    %5 = vector.load %arg9[%c0_2, %c0_3] : memref<8x128xf32, #tpu.memory_space<vmem>>, vector<8x128xf32>
    %c0_4 = arith.constant 0 : index
    %c0_5 = arith.constant 0 : index
    %6 = memref.load %arg2[%c0_4, %c0_5] : memref<2x3xf32, #tpu.memory_space<smem>>
    %c0_6 = arith.constant 0 : index
    %c0_7 = arith.constant 0 : index
    %c0_8 = arith.constant 0 : index
    %7 = vector.load %arg4[%c0_6, %c0_7, %c0_8] : memref<3x256x128xbf16, #tpu.memory_space<vmem>>, vector<1x256x128xbf16>
    %8 = vector.shape_cast %7 : vector<1x256x128xbf16> to vector<256x128xbf16>
    %cst = arith.constant dense<0.000000e+00> : vector<8x128xf32>
    %9 = tpu.matmul %4, %8, %cst {dimension_numbers = #tpu.dot_dimension_numbers<[1], [0], [0], [1], [0, 0, 1, 1], [], []>} : vector<8x256xbf16>, vector<256x128xbf16>, vector<8x128xf32> -> vector<8x128xf32>
    %10 = vector.broadcast %6 : f32 to vector<8x128xf32>
    %11 = arith.mulf %10, %9 : vector<8x128xf32>
    %12 = arith.addf %5, %11 : vector<8x128xf32>
    %c0_9 = arith.constant 0 : index
    %c1 = arith.constant 1 : index
    %13 = memref.load %arg2[%c0_9, %c1] : memref<2x3xf32, #tpu.memory_space<smem>>
    %c1_10 = arith.constant 1 : index
    %c0_11 = arith.constant 0 : index
    %c0_12 = arith.constant 0 : index
    %14 = vector.load %arg4[%c1_10, %c0_11, %c0_12] : memref<3x256x128xbf16, #tpu.memory_space<vmem>>, vector<1x256x128xbf16>
    %15 = vector.shape_cast %14 : vector<1x256x128xbf16> to vector<256x128xbf16>
    %cst_13 = arith.constant dense<0.000000e+00> : vector<8x128xf32>
    %16 = tpu.matmul %4, %15, %cst_13 {dimension_numbers = #tpu.dot_dimension_numbers<[1], [0], [0], [1], [0, 0, 1, 1], [], []>} : vector<8x256xbf16>, vector<256x128xbf16>, vector<8x128xf32> -> vector<8x128xf32>
    %17 = vector.broadcast %13 : f32 to vector<8x128xf32>
    %18 = arith.mulf %17, %16 : vector<8x128xf32>
    %19 = arith.addf %12, %18 : vector<8x128xf32>
    %c0_14 = arith.constant 0 : index
    %c2 = arith.constant 2 : index
    %20 = memref.load %arg2[%c0_14, %c2] : memref<2x3xf32, #tpu.memory_space<smem>>
    %c2_15 = arith.constant 2 : index
    %c0_16 = arith.constant 0 : index
    %c0_17 = arith.constant 0 : index
    %21 = vector.load %arg4[%c2_15, %c0_16, %c0_17] : memref<3x256x128xbf16, #tpu.memory_space<vmem>>, vector<1x256x128xbf16>
    %22 = vector.shape_cast %21 : vector<1x256x128xbf16> to vector<256x128xbf16>
    %cst_18 = arith.constant dense<0.000000e+00> : vector<8x128xf32>
    %23 = tpu.matmul %4, %22, %cst_18 {dimension_numbers = #tpu.dot_dimension_numbers<[1], [0], [0], [1], [0, 0, 1, 1], [], []>} : vector<8x256xbf16>, vector<256x128xbf16>, vector<8x128xf32> -> vector<8x128xf32>
    %24 = vector.broadcast %20 : f32 to vector<8x128xf32>
    %25 = arith.mulf %24, %23 : vector<8x128xf32>
    %26 = arith.addf %19, %25 : vector<8x128xf32>
    %c0_19 = arith.constant 0 : index
    %c0_20 = arith.constant 0 : index
    %27 = vector.load %arg9[%c0_19, %c0_20] : memref<8x128xf32, #tpu.memory_space<vmem>>, vector<8x128xf32>
    tpu.vector_store %arg9[%c0_19, %c0_20], %26 {strides = array<i32>} : memref<8x128xf32, #tpu.memory_space<vmem>>, vector<8x128xf32>,
    %c3_i32 = arith.constant 3 : i32
    %28 = arith.cmpi eq, %arg1, %c3_i32 : i32
    %29 = arith.extui %28 : i1 to i32
    %c0_i32_21 = arith.constant 0 : i32
    %30 = arith.cmpi ne, %29, %c0_i32_21 : i32
    scf.if %30 {
      %c1_22 = arith.constant 1 : index
      %c0_23 = arith.constant 0 : index
      %31 = memref.load %arg2[%c1_22, %c0_23] : memref<2x3xf32, #tpu.memory_space<smem>>
      %c0_24 = arith.constant 0 : index
      %c0_25 = arith.constant 0 : index
      %c0_26 = arith.constant 0 : index
      %32 = vector.load %arg5[%c0_24, %c0_25, %c0_26] : memref<3x1x128xf32, #tpu.memory_space<vmem>>, vector<1x1x128xf32>
      %33 = vector.shape_cast %32 : vector<1x1x128xf32> to vector<1x128xf32>
      %34 = vector.broadcast %31 : f32 to vector<1x128xf32>
      %35 = arith.mulf %34, %33 : vector<1x128xf32>
      %c1_27 = arith.constant 1 : index
      %c1_28 = arith.constant 1 : index
      %36 = memref.load %arg2[%c1_27, %c1_28] : memref<2x3xf32, #tpu.memory_space<smem>>
      %c1_29 = arith.constant 1 : index
      %c0_30 = arith.constant 0 : index
      %c0_31 = arith.constant 0 : index
      %37 = vector.load %arg5[%c1_29, %c0_30, %c0_31] : memref<3x1x128xf32, #tpu.memory_space<vmem>>, vector<1x1x128xf32>
      %38 = vector.shape_cast %37 : vector<1x1x128xf32> to vector<1x128xf32>
      %39 = vector.broadcast %36 : f32 to vector<1x128xf32>
      %40 = arith.mulf %39, %38 : vector<1x128xf32>
      %41 = arith.addf %35, %40 : vector<1x128xf32>
      %c1_32 = arith.constant 1 : index
      %c2_33 = arith.constant 2 : index
      %42 = memref.load %arg2[%c1_32, %c2_33] : memref<2x3xf32, #tpu.memory_space<smem>>
      %c2_34 = arith.constant 2 : index
      %c0_35 = arith.constant 0 : index
      %c0_36 = arith.constant 0 : index
      %43 = vector.load %arg5[%c2_34, %c0_35, %c0_36] : memref<3x1x128xf32, #tpu.memory_space<vmem>>, vector<1x1x128xf32>
      %44 = vector.shape_cast %43 : vector<1x1x128xf32> to vector<1x128xf32>
      %45 = vector.broadcast %42 : f32 to vector<1x128xf32>
      %46 = arith.mulf %45, %44 : vector<1x128xf32>
      %47 = arith.addf %41, %46 : vector<1x128xf32>
      %c0_37 = arith.constant 0 : index
      %c0_38 = arith.constant 0 : index
      %48 = vector.load %arg9[%c0_37, %c0_38] : memref<8x128xf32, #tpu.memory_space<vmem>>, vector<8x128xf32>
      %49 = vector.broadcast %47 : vector<1x128xf32> to vector<8x128xf32>
      %50 = arith.addf %48, %49 : vector<8x128xf32>
      %c0_39 = arith.constant 0 : index
      %c0_40 = arith.constant 0 : index
      %51 = vector.load %arg6[%c0_39, %c0_40] : memref<128x128xf32, #tpu.memory_space<vmem>>, vector<128x128xf32>
      %cst_41 = arith.constant dense<0.000000e+00> : vector<8x128xf32>
      %52 = tpu.matmul %50, %51, %cst_41 {dimension_numbers = #tpu.dot_dimension_numbers<[1], [0], [0], [1], [0, 0, 1, 1], [], []>} : vector<8x128xf32>, vector<128x128xf32>, vector<8x128xf32> -> vector<8x128xf32>
      %c0_42 = arith.constant 0 : index
      %c0_43 = arith.constant 0 : index
      %53 = vector.load %arg7[%c0_42, %c0_43] : memref<1x128xf32, #tpu.memory_space<vmem>>, vector<1x128xf32>
      %54 = vector.broadcast %53 : vector<1x128xf32> to vector<8x128xf32>
      %55 = arith.addf %52, %54 : vector<8x128xf32>
      %c0_44 = arith.constant 0 : index
      %c0_45 = arith.constant 0 : index
      %56 = vector.load %arg8[%c0_44, %c0_45] : memref<8x128xf32, #tpu.memory_space<vmem>>, vector<8x128xf32>
      tpu.vector_store %arg8[%c0_44, %c0_45], %55 {strides = array<i32>} : memref<8x128xf32, #tpu.memory_space<vmem>>, vector<8x128xf32>,
    } else {
    }
    return
  }
  func.func @transform_0(%arg0: i32, %arg1: i32) -> (i32, i32) {
    %c0_i32 = arith.constant 0 : i32
    %c0_i32_0 = arith.constant 0 : i32
    %c0_i32_1 = arith.constant 0 : i32
    return %c0_i32, %c0_i32_0 : i32, i32
  }
  func.func @transform_1(%arg0: i32, %arg1: i32) -> (i32, i32) {
    %c0_i32 = arith.constant 0 : i32
    return %arg0, %arg1 : i32, i32
  }
  func.func @transform_2(%arg0: i32, %arg1: i32) -> (i32, i32, i32) {
    %c0_i32 = arith.constant 0 : i32
    %c0_i32_0 = arith.constant 0 : i32
    %c0_i32_1 = arith.constant 0 : i32
    return %c0_i32, %arg1, %c0_i32_0 : i32, i32, i32
  }
  func.func @transform_3(%arg0: i32, %arg1: i32) -> (i32, i32, i32) {
    %c0_i32 = arith.constant 0 : i32
    %c0_i32_0 = arith.constant 0 : i32
    %c0_i32_1 = arith.constant 0 : i32
    %c0_i32_2 = arith.constant 0 : i32
    return %c0_i32, %c0_i32_0, %c0_i32_1 : i32, i32, i32
  }
  func.func @transform_4(%arg0: i32, %arg1: i32) -> (i32, i32) {
    %c0_i32 = arith.constant 0 : i32
    %c0_i32_0 = arith.constant 0 : i32
    %c0_i32_1 = arith.constant 0 : i32
    return %c0_i32, %c0_i32_0 : i32, i32
  }
  func.func @transform_5(%arg0: i32, %arg1: i32) -> (i32, i32) {
    %c0_i32 = arith.constant 0 : i32
    %c0_i32_0 = arith.constant 0 : i32
    %c0_i32_1 = arith.constant 0 : i32
    return %c0_i32, %c0_i32_0 : i32, i32
  }
  func.func @transform_6(%arg0: i32, %arg1: i32) -> (i32, i32) {
    %c0_i32 = arith.constant 0 : i32
    %c0_i32_0 = arith.constant 0 : i32
    return %arg0, %c0_i32 : i32, i32
  }
}

</mosaic_0001>

<llo_original>
// kernel: tpu_custom_call.1
$region0: #{tpu_custom_call.1}
  #allocation0 [shape = 'u32[]', space=smem, size = 0x4, offset = 0x4, fixed_abs, tag = 'smem constant byte address 0x4 - core index']
  #allocation1 [shape = 'u32[72,128]{1,0:T(1,128)}', space=vmem, size = 0x9000, scoped, tag = 'internal scratch']
  #allocation2 [shape = 'f32[8,128]{1,0:T(8,128)}', space=vmem, size = 0x1000, scoped, tag = 'scratch operand']
  #allocation14 [shape = 's32[]', space=sflag, size = 0x4, offset = 0, fixed_abs, tag = 'sflag constant byte address 0x0 - dummy sync flag']
  %s0 = inlined_call_operand.hbm [shape: f32[2,3], index: 0, kind: input, shape index: {}]
  %s1 = inlined_call_operand.hbm [shape: f32[8,1024], index: 1, kind: input, shape index: {}]
  %s2 = inlined_call_operand.hbm [shape: bf16[3,1024,128], index: 2, kind: input, shape index: {}]
  %s3 = inlined_call_operand.hbm [shape: f32[3,1,128], index: 3, kind: input, shape index: {}]
  %s4 = inlined_call_operand.hbm [shape: f32[128,128], index: 4, kind: input, shape index: {}]
  %s5 = inlined_call_operand.vmem [shape: f32[1,128], index: 5, kind: input, shape index: {}]
  %s6 = inlined_call_operand.hbm [shape: f32[8,128], index: 6, kind: output, shape index: {}]
  %s7 = sld [smem:[#allocation0]]
  $region85: #{tpu_custom_call.1} parent=0
    _
  %s9 = ssub.s32 1, %s7
  %s10 = scalar_select 0, %s9, %s7
  $region1: #{tpu_custom_call.1} parent=0
    #allocation3 [shape = 'u8[1024]{0}', space=smem, size = 0x400, scoped, tag = 'input window, operand 0, single buffered']
    #allocation4 [shape = 's32[2]{0}', space=sflag, size = 0x8, scoped, tag = 'scoped memory for tpu_custom_call.1']
    #allocation5 [shape = 's32[2]{0}', space=sflag, size = 0x8, scoped, tag = 'scoped memory for tpu_custom_call.1']
    #allocation6 [shape = 's32[2]{0}', space=sflag, size = 0x8, scoped, tag = 'scoped memory for tpu_custom_call.1']
    #allocation7 [shape = 'u8[16384]{0}', space=vmem, size = 0x4000, scoped, tag = 'input window, operand 1']
    #allocation8 [shape = 'u8[393216]{0}', space=vmem, size = 0x60000, scoped, tag = 'input window, operand 2']
    #allocation9 [shape = 's32[2]{0}', space=sflag, size = 0x8, scoped, tag = 'scoped memory for tpu_custom_call.1']
    #allocation10 [shape = 'u8[1536]{0}', space=vmem, size = 0x800, scoped, tag = 'input window, operand 3, single buffered']
    #allocation11 [shape = 'u8[65536]{0}', space=vmem, size = 0x10000, scoped, tag = 'input window, operand 4, single buffered']
    #allocation12 [shape = 's32[1]{0}', space=sflag, size = 0x4, scoped, tag = 'scoped memory for tpu_custom_call.1']
    #allocation13 [shape = 'u8[4096]{0}', space=vmem, size = 0x1000, scoped, tag = 'output window, operand 0, single buffered']
    %11 = vsyncpa [#allocation6], 0
    %12 = vsyncpa [#allocation4], 0
    %s13 = scalar_lea.sflag [#allocation4], 1
    %14 = vsyncpa %s13, 0
    %15 = vsyncpa [#allocation9], 0
    %s16 = scalar_lea.sflag [#allocation9], 1
    %17 = vsyncpa %s16, 0
    %18 = vsyncpa [#allocation12], 0
    %19 = vsyncpa [#allocation5], 0
    loop: start=0, step=1, limit=6
    $region2: #{tpu_custom_call.1} parent=1 // loop_pre_header
      _
    $region3: #{tpu_custom_call.1} parent=1 // loop_header
      %s21 = sphi 0, %s25
      %p22 = scmp.ge.s32.totalorder %s21, 6
      %s28 = sphi 0, %s40
      %s29 = sphi 0, %s36
      %s30 = sphi 0, %s28
      %s31 = sphi 0, %s29
      %s32 = sphi 0, %s30
      %s33 = sphi 0, %s31
      %s41 = sphi 0, %s41
      %s43 = sphi 0, %s41
      %s44 = sphi 0, %s43
      %s58 = sphi 0, %s44
      %s66 = sphi 0, %s68
      %s69 = sphi 0, %s66
      %s70 = sphi 0, %s69
      %s86 = sphi 0, %s70
      %s92 = sphi 0, %s94
      %s95 = sphi 0, %s92
      %s96 = sphi 0, %s95
      %s112 = sphi 0, %s96
      %s116 = sphi 0, %s116
      %s118 = sphi 0, %s116
      %s119 = sphi 0, %s118
      %s133 = sphi 0, %s119
      %s137 = sphi 0, %s137
      %s139 = sphi 0, %s137
      %s140 = sphi 0, %s139
      %s154 = sphi 0, %s140
      %s158 = sphi 0, %s158
      %s160 = sphi 0, %s158
      %s161 = sphi 0, %s160
      %s175 = sphi 0, %s161
      %s181 = sphi 0, %s183
      %s184 = sphi 0, %s181
      %s185 = sphi 0, %s184
      %s201 = sphi 0, %s185
    $region4: #{tpu_custom_call.1} parent=1 // loop_header_branch
      %24 = sbr.rel (%p22) target = $region8
    $region5: #{tpu_custom_call.1} parent=1 // loop_body
      %s26 = ssub.s32 %s21, 1
      %s27 = ssub.s32 %s21, 2
      %s34 = sadd.s32 1, %s29
      %p35 = scmp.ge.s32.totalorder %s34, 4
      %s36 = scalar_select %p35, 0, %s34
      %s37 = sadd.s32 1, %s28
      %s38 = scalar_select %p35, %s37, %s28
      %p39 = scmp.ge.s32.totalorder %s38, 1
      %s40 = scalar_select %p39, 0, %s38
      %s42 = sadd.s32 %s41, 1
      %p45 = scmp.eq.s32.totalorder %s21, 3
      %p46 = scmp.ne.s32.totalorder %s41, %s43
      %p47 = scmp.eq.s32.totalorder %s21, 0
      %p48 = por %p46, %p47
      %p49 = scmp.ne.s32.totalorder %s41, %s43
      %p50 = scmp.eq.s32.totalorder %s26, 3
      %p51 = por %p49, %p50
      %p52 = scmp.ne.s32.totalorder %s43, %s44
      %p53 = scmp.eq.s32.totalorder %s26, 0
      %p54 = por %p52, %p53
      %p55 = scmp.ne.s32.totalorder %s43, %s44
      %p56 = scmp.eq.s32.totalorder %s27, 3
      %p57 = por %p55, %p56
      %p59 = scmp.ne.s32.totalorder %s44, %s58
      %p60 = scmp.eq.s32.totalorder %s27, 0
      %p61 = por %p59, %p60
      %s62 = ssub.s32 %s28, %s40
      %s63 = ssub.s32 %s29, %s36
      %s64 = sor.u32 %s62, %s63
      %p65 = scmp.eq.s32.totalorder %s64, 0
      %s67 = sadd.s32 %s66, 1
      %s68 = scalar_select %p65, %s66, %s67
      %p71 = pneg %p65
      %p72 = scmp.eq.s32.totalorder %s21, 3
      %p73 = por %p71, %p72
      %p74 = scmp.ne.s32.totalorder %s66, %s69
      %p75 = scmp.eq.s32.totalorder %s21, 0
      %p76 = por %p74, %p75
      %p77 = scmp.ne.s32.totalorder %s66, %s69
      %p78 = scmp.eq.s32.totalorder %s26, 3
      %p79 = por %p77, %p78
      %p80 = scmp.ne.s32.totalorder %s69, %s70
      %p81 = scmp.eq.s32.totalorder %s26, 0
      %p82 = por %p80, %p81
      %p83 = scmp.ne.s32.totalorder %s69, %s70
      %p84 = scmp.eq.s32.totalorder %s27, 3
      %p85 = por %p83, %p84
      %p87 = scmp.ne.s32.totalorder %s70, %s86
      %p88 = scmp.eq.s32.totalorder %s27, 0
      %p89 = por %p87, %p88
      %s90 = ssub.s32 %s29, %s36
      %p91 = scmp.eq.s32.totalorder %s90, 0
      %s93 = sadd.s32 %s92, 1
      %s94 = scalar_select %p91, %s92, %s93
      %p97 = pneg %p91
      %p98 = scmp.eq.s32.totalorder %s21, 3
      %p99 = por %p97, %p98
      %p100 = scmp.ne.s32.totalorder %s92, %s95
      %p101 = scmp.eq.s32.totalorder %s21, 0
      %p102 = por %p100, %p101
      %p103 = scmp.ne.s32.totalorder %s92, %s95
      %p104 = scmp.eq.s32.totalorder %s26, 3
      %p105 = por %p103, %p104
      %p106 = scmp.ne.s32.totalorder %s95, %s96
      %p107 = scmp.eq.s32.totalorder %s26, 0
      %p108 = por %p106, %p107
      %p109 = scmp.ne.s32.totalorder %s95, %s96
      %p110 = scmp.eq.s32.totalorder %s27, 3
      %p111 = por %p109, %p110
      %p113 = scmp.ne.s32.totalorder %s96, %s112
      %p114 = scmp.eq.s32.totalorder %s27, 0
      %p115 = por %p113, %p114
      %s117 = sadd.s32 %s116, 1
      %p120 = scmp.eq.s32.totalorder %s21, 3
      %p121 = scmp.ne.s32.totalorder %s116, %s118
      %p122 = scmp.eq.s32.totalorder %s21, 0
      %p123 = por %p121, %p122
      %p124 = scmp.ne.s32.totalorder %s116, %s118
      %p125 = scmp.eq.s32.totalorder %s26, 3
      %p126 = por %p124, %p125
      %p127 = scmp.ne.s32.totalorder %s118, %s119
      %p128 = scmp.eq.s32.totalorder %s26, 0
      %p129 = por %p127, %p128
      %p130 = scmp.ne.s32.totalorder %s118, %s119
      %p131 = scmp.eq.s32.totalorder %s27, 3
      %p132 = por %p130, %p131
      %p134 = scmp.ne.s32.totalorder %s119, %s133
      %p135 = scmp.eq.s32.totalorder %s27, 0
      %p136 = por %p134, %p135
      %s138 = sadd.s32 %s137, 1
      %p141 = scmp.eq.s32.totalorder %s21, 3
      %p142 = scmp.ne.s32.totalorder %s137, %s139
      %p143 = scmp.eq.s32.totalorder %s21, 0
      %p144 = por %p142, %p143
      %p145 = scmp.ne.s32.totalorder %s137, %s139
      %p146 = scmp.eq.s32.totalorder %s26, 3
      %p147 = por %p145, %p146
      %p148 = scmp.ne.s32.totalorder %s139, %s140
      %p149 = scmp.eq.s32.totalorder %s26, 0
      %p150 = por %p148, %p149
      %p151 = scmp.ne.s32.totalorder %s139, %s140
      %p152 = scmp.eq.s32.totalorder %s27, 3
      %p153 = por %p151, %p152
      %p155 = scmp.ne.s32.totalorder %s140, %s154
      %p156 = scmp.eq.s32.totalorder %s27, 0
      %p157 = por %p155, %p156
      %s159 = sadd.s32 %s158, 1
      %p162 = scmp.eq.s32.totalorder %s21, 3
      %p163 = scmp.ne.s32.totalorder %s158, %s160
      %p164 = scmp.eq.s32.totalorder %s21, 0
      %p165 = por %p163, %p164
      %p166 = scmp.ne.s32.totalorder %s158, %s160
      %p167 = scmp.eq.s32.totalorder %s26, 3
      %p168 = por %p166, %p167
      %p169 = scmp.ne.s32.totalorder %s160, %s161
      %p170 = scmp.eq.s32.totalorder %s26, 0
      %p171 = por %p169, %p170
      %p172 = scmp.ne.s32.totalorder %s160, %s161
      %p173 = scmp.eq.s32.totalorder %s27, 3
      %p174 = por %p172, %p173
      %p176 = scmp.ne.s32.totalorder %s161, %s175
      %p177 = scmp.eq.s32.totalorder %s27, 0
      %p178 = por %p176, %p177
      %s179 = ssub.s32 %s28, %s40
      %p180 = scmp.eq.s32.totalorder %s179, 0
      %s182 = sadd.s32 %s181, 1
      %s183 = scalar_select %p180, %s181, %s182
      %p186 = pneg %p180
      %p187 = scmp.eq.s32.totalorder %s21, 3
      %p188 = por %p186, %p187
      %p189 = scmp.ne.s32.totalorder %s181, %s184
      %p190 = scmp.eq.s32.totalorder %s21, 0
      %p191 = por %p189, %p190
      %p192 = scmp.ne.s32.totalorder %s181, %s184
      %p193 = scmp.eq.s32.totalorder %s26, 3
      %p194 = por %p192, %p193
      %p195 = scmp.ne.s32.totalorder %s184, %s185
      %p196 = scmp.eq.s32.totalorder %s26, 0
      %p197 = por %p195, %p196
      %p198 = scmp.ne.s32.totalorder %s184, %s185
      %p199 = scmp.eq.s32.totalorder %s27, 3
      %p200 = por %p198, %p199
      %p202 = scmp.ne.s32.totalorder %s185, %s201
      %p203 = scmp.eq.s32.totalorder %s27, 0
      %p204 = por %p202, %p203
      %p205 = scmp.le.s32.totalorder 1, %s21
      %p206 = scmp.lt.s32.totalorder %s21, 5
      %p207 = pnand %p205, %p206
      %p208 = pneg %p207
      // Predicated region
      $region9: #{tpu_custom_call.1} parent=5 // pred_check
        _
      $region10: #{tpu_custom_call.1} parent=5 // pred_check_branch
        %210 = sbr.rel (%p207) target = $region12
      $region11: #{tpu_custom_call.1} parent=5 // pred_region
        %s211 = ssub.s32 %s21, 1
        // Predicated region
        $region13: #{tpu_custom_call.1} parent=11 // pred_check
          %p212 = pneg %p54
        $region14: #{tpu_custom_call.1} parent=11 // pred_check_branch
          %214 = sbr.rel (%p212) target = $region16
        $region15: #{tpu_custom_call.1} parent=11 // pred_region
          %216 = vsyncadd [#allocation6], 0
          %s218 = sshll.u32 %s0, 4
          %s219 = int_to_ptr.hbm [resolvable:$true] %s218
          %221 = dma.hbm_to_smem %s219, 32, [#allocation3], [#allocation6]
        $region16: #{tpu_custom_call.1} parent=11 // pred_fallthru
          _
        // Predicated region
        $region17: #{tpu_custom_call.1} parent=11 // pred_check
          %p222 = pneg %p129
        $region18: #{tpu_custom_call.1} parent=11 // pred_check_branch
          %224 = sbr.rel (%p222) target = $region20
        $region19: #{tpu_custom_call.1} parent=11 // pred_region
          %226 = vsyncadd [#allocation9], 0
          %s227 = sshll.u32 %s3, 4
          %s228 = int_to_ptr.hbm [resolvable:$true] %s227
          %s229 = sshll.u32 [#allocation10], 4
          %s230 = int_to_ptr.vmem [resolvable:$true] %s229
          %235 = dma.hbm_to_vmem [thread:$0]  %s228, 48, %s230, [#allocation9], 16, 16, 1
        $region20: #{tpu_custom_call.1} parent=11 // pred_fallthru
          _
        // Predicated region
        $region21: #{tpu_custom_call.1} parent=11 // pred_check
          %p236 = pneg %p150
        $region22: #{tpu_custom_call.1} parent=11 // pred_check_branch
          %238 = sbr.rel (%p236) target = $region24
        $region23: #{tpu_custom_call.1} parent=11 // pred_region
          %240 = vsyncadd [#allocation12], 0
          %s241 = sshll.u32 %s4, 4
          %s242 = int_to_ptr.hbm [resolvable:$true] %s241
          %s243 = sshll.u32 [#allocation11], 4
          %s244 = int_to_ptr.vmem [resolvable:$true] %s243
          %249 = dma.hbm_to_vmem [thread:$0]  %s242, 2048, %s244, [#allocation12], 128, 128, 8
        $region24: #{tpu_custom_call.1} parent=11 // pred_fallthru
          _
        // Predicated region
        $region25: #{tpu_custom_call.1} parent=11 // pred_check
          %p250 = pneg %p171
        $region26: #{tpu_custom_call.1} parent=11 // pred_check_branch
          %252 = sbr.rel (%p250) target = $region28
        $region27: #{tpu_custom_call.1} parent=11 // pred_region
          _
        $region28: #{tpu_custom_call.1} parent=11 // pred_fallthru
          _
      $region12: #{tpu_custom_call.1} parent=5 // pred_fallthru
        _
      %p253 = scmp.lt.s32.totalorder %s21, 4
      // Predicated region
      $region29: #{tpu_custom_call.1} parent=5 // pred_check
        %p254 = pneg %p253
      $region30: #{tpu_custom_call.1} parent=5 // pred_check_branch
        %256 = sbr.rel (%p254) target = $region32
      $region31: #{tpu_custom_call.1} parent=5 // pred_region
        // Predicated region
        $region33: #{tpu_custom_call.1} parent=31 // pred_check
          %p257 = pneg %p76
        $region34: #{tpu_custom_call.1} parent=31 // pred_check_branch
          %259 = sbr.rel (%p257) target = $region36
        $region35: #{tpu_custom_call.1} parent=31 // pred_region
          %s260 = sand.u32 %s66, 1
          %s261 = scalar_lea.sflag [#allocation4], %s260
          %s262 = sand.u32 %s66, 1
          %s263 = smul.addr %s262, 16
          %s264 = scalar_lea.vmem [#allocation7], %s263
          %s265 = smul.u32 2, %s29
          %267 = vsyncadd %s261, 0
          %s268 = smul.addr %s28, 8
          %s269 = sadd.s32 %s265, %s268
          %s270 = smul.addr %s269, 8
          %s271 = scalar_lea.hbm %s1, %s270
          %s273 = sshll.u32 %s271, 4
          %s274 = int_to_ptr.hbm [resolvable:$true] %s273
          %s275 = sshll.u32 %s264, 4
          %s276 = int_to_ptr.vmem [resolvable:$true] %s275
          %278 = dma.hbm_to_vmem [thread:$0]  %s274, 256, %s276, %s261
        $region36: #{tpu_custom_call.1} parent=31 // pred_fallthru
          _
        // Predicated region
        $region37: #{tpu_custom_call.1} parent=31 // pred_check
          %p279 = pneg %p102
        $region38: #{tpu_custom_call.1} parent=31 // pred_check_branch
          %281 = sbr.rel (%p279) target = $region40
        $region39: #{tpu_custom_call.1} parent=31 // pred_region
          #allocation15 [shape = 'u32[6]{0}', space=smem, size = 0x18, scoped, tag = 'DMA stride descriptor']
          %s282 = sand.u32 %s21, 1
          %s283 = scalar_lea.sflag [#allocation9], %s282
          %s284 = sand.u32 %s92, 1
          %s285 = smul.addr %s284, 384
          %s286 = scalar_lea.vmem [#allocation8], %s285
          %s287 = smul.u32 32, %s29
          %289 = vsyncadd %s283, 0
          %s290 = smul.addr %s287, 4
          %s291 = scalar_lea.hbm %s2, %s290
          %s293 = sshll.u32 1, 14
          %s294 = sxor.u32 4294967295, %s293
          %s296 = sld [smem:[#allocation0]]
          %s297 = sadd.s32 2, %s296
          %s299 = sshll.u32 7, 26
          %s300 = sxor.u32 4294967295, %s299
          %s301 = sand.u32 0, %s300
          %s302 = sshll.u32 %s297, 26
          %s303 = sor.u32 %s301, %s302
          %s304 = sshll.u32 %s291, 4
          %s305 = int_to_ptr.hbm [resolvable:$true] %s304
          %s306 = sshll.u32 %s286, 4
          %s307 = int_to_ptr.vmem [resolvable:$true] %s306
          %313 = sst [smem:[#allocation15]] 8192
          %s314 = scalar_lea.smem [#allocation15], 1
          %315 = sst [smem:[%s314]] 2048
          %s316 = scalar_lea.smem [#allocation15], 2
          %317 = sst [smem:[%s316]] 32
          %s318 = scalar_lea.smem [#allocation15], 3
          %319 = sst [smem:[%s318]] 64
          %s320 = scalar_lea.smem [#allocation15], 4
          %321 = sst [smem:[%s320]] 64
          %s322 = scalar_lea.smem [#allocation15], 5
          %323 = sst [smem:[%s322]] 4
          %325 = dma.general %s305, 6144, %s307, %s283, [#allocation14], [#allocation15], %s303, 0
        $region40: #{tpu_custom_call.1} parent=31 // pred_fallthru
          _
      $region32: #{tpu_custom_call.1} parent=5 // pred_fallthru
        _
      %p326 = scmp.le.s32.totalorder 1, %s21
      %p327 = scmp.lt.s32.totalorder %s21, 5
      %p328 = pnand %p326, %p327
      %p329 = pneg %p328
      // Predicated region
      $region41: #{tpu_custom_call.1} parent=5 // pred_check
        _
      $region42: #{tpu_custom_call.1} parent=5 // pred_check_branch
        %331 = sbr.rel (%p328) target = $region44
      $region43: #{tpu_custom_call.1} parent=5 // pred_region
        %s332 = ssub.s32 %s21, 1
        // Predicated region
        $region45: #{tpu_custom_call.1} parent=43 // pred_check
          %p333 = pneg %p54
        $region46: #{tpu_custom_call.1} parent=43 // pred_check_branch
          %335 = sbr.rel (%p333) target = $region48
        $region47: #{tpu_custom_call.1} parent=43 // pred_region
          %337 = dma.done [#allocation6], 32
        $region48: #{tpu_custom_call.1} parent=43 // pred_fallthru
          _
        %s338 = sand.u32 %s69, 1
        %s339 = scalar_lea.sflag [#allocation4], %s338
        %s340 = sand.u32 %s69, 1
        %s341 = smul.addr %s340, 16
        %s342 = scalar_lea.vmem [#allocation7], %s341
        // Predicated region
        $region49: #{tpu_custom_call.1} parent=43 // pred_check
          %p343 = pneg %p82
        $region50: #{tpu_custom_call.1} parent=43 // pred_check_branch
          %345 = sbr.rel (%p343) target = $region52
        $region51: #{tpu_custom_call.1} parent=43 // pred_region
          %347 = dma.done %s339, 256
        $region52: #{tpu_custom_call.1} parent=43 // pred_fallthru
          _
        %s348 = sand.u32 %s26, 1
        %s349 = scalar_lea.sflag [#allocation9], %s348
        %s350 = sand.u32 %s95, 1
        %s351 = smul.addr %s350, 384
        %s352 = scalar_lea.vmem [#allocation8], %s351
        // Predicated region
        $region53: #{tpu_custom_call.1} parent=43 // pred_check
          %p353 = pneg %p108
        $region54: #{tpu_custom_call.1} parent=43 // pred_check_branch
          %355 = sbr.rel (%p353) target = $region56
        $region55: #{tpu_custom_call.1} parent=43 // pred_region
          %357 = dma.done %s349, 6144
        $region56: #{tpu_custom_call.1} parent=43 // pred_fallthru
          _
        // Predicated region
        $region57: #{tpu_custom_call.1} parent=43 // pred_check
          %p358 = pneg %p129
        $region58: #{tpu_custom_call.1} parent=43 // pred_check_branch
          %360 = sbr.rel (%p358) target = $region60
        $region59: #{tpu_custom_call.1} parent=43 // pred_region
          %362 = dma.done [#allocation9], 48
        $region60: #{tpu_custom_call.1} parent=43 // pred_fallthru
          _
        // Predicated region
        $region61: #{tpu_custom_call.1} parent=43 // pred_check
          %p363 = pneg %p150
        $region62: #{tpu_custom_call.1} parent=43 // pred_check_branch
          %365 = sbr.rel (%p363) target = $region64
        $region63: #{tpu_custom_call.1} parent=43 // pred_region
          %367 = dma.done [#allocation12], 2048
        $region64: #{tpu_custom_call.1} parent=43 // pred_fallthru
          _
        %368 = sfence
        %p369 = pneg %p54
        %p370 = pneg %p51
        %s371 = sand.u32 %s69, 1
        %s372 = scalar_lea.sflag [#allocation4], %s371
        %s373 = sand.u32 %s69, 1
        %s374 = smul.addr %s373, 16
        %s375 = scalar_lea.vmem [#allocation7], %s374
        %p376 = pneg %p82
        %p377 = pneg %p79
        %s378 = sand.u32 %s26, 1
        %s379 = scalar_lea.sflag [#allocation9], %s378
        %s380 = sand.u32 %s95, 1
        %s381 = smul.addr %s380, 384
        %s382 = scalar_lea.vmem [#allocation8], %s381
        %p383 = pneg %p108
        %p384 = pneg %p105
        %p385 = pneg %p129
        %p386 = pneg %p126
        %p387 = pneg %p150
        %p388 = pneg %p147
        %p389 = pneg %p171
        %p390 = pneg %p168
        %p391 = pneg %p197
        %p392 = pneg %p194
        %s393 = smul.u32 2, %s31
        %s394 = smul.u32 32, %s31
        %p395 = scmp.eq.s32.totalorder %s31, 0
        // Predicated region
        $region65: #{tpu_custom_call.1} parent=43 // pred_check
          %p396 = pneg %p395
        $region66: #{tpu_custom_call.1} parent=43 // pred_check_branch
          %398 = sbr.rel (%p396) target = $region68
        $region67: #{tpu_custom_call.1} parent=43 // pred_region
          %399 = vst [vmem:[#allocation2] sm:$0xff] 0.0
        $region68: #{tpu_custom_call.1} parent=43 // pred_fallthru
          _
        %v400 = vld [vmem:[%s342] sm:$0xff]
        %v401 = vld [vmem:[%s342 + $0x8] sm:$0xff]
        %v402 = vpack.c.bf16 %v400, %v400
        %v403 = vpack.c.bf16 %v401, %v401
        %v404 = vld [vmem:[#allocation2] sm:$0xff]
        %s405 = sld [smem:[#allocation3]]
        %v406 = vld [vmem:[%s352] sm:$0xf]
        %v407 = vld [vmem:[%s352 + $0x4] sm:$0xf]
        %v408 = vld [vmem:[%s352 + $0x8] sm:$0xf]
        %v409 = vld [vmem:[%s352 + $0xc] sm:$0xf]
        %v410 = vld [vmem:[%s352 + $0x10] sm:$0xf]
        %v411 = vld [vmem:[%s352 + $0x14] sm:$0xf]
        %v412 = vld [vmem:[%s352 + $0x18] sm:$0xf]
        %v413 = vld [vmem:[%s352 + $0x1c] sm:$0xf]
        %v414 = vld [vmem:[%s352 + $0x20] sm:$0xf]
        %v415 = vld [vmem:[%s352 + $0x24] sm:$0xf]
        %v416 = vld [vmem:[%s352 + $0x28] sm:$0xf]
        %v417 = vld [vmem:[%s352 + $0x2c] sm:$0xf]
        %v418 = vld [vmem:[%s352 + $0x30] sm:$0xf]
        %v419 = vld [vmem:[%s352 + $0x34] sm:$0xf]
        %v420 = vld [vmem:[%s352 + $0x38] sm:$0xf]
        %v421 = vld [vmem:[%s352 + $0x3c] sm:$0xf]
        %v422 = vld [vmem:[%s352 + $0x40] sm:$0xf]
        %v423 = vld [vmem:[%s352 + $0x44] sm:$0xf]
        %v424 = vld [vmem:[%s352 + $0x48] sm:$0xf]
        %v425 = vld [vmem:[%s352 + $0x4c] sm:$0xf]
        %v426 = vld [vmem:[%s352 + $0x50] sm:$0xf]
        %v427 = vld [vmem:[%s352 + $0x54] sm:$0xf]
        %v428 = vld [vmem:[%s352 + $0x58] sm:$0xf]
        %v429 = vld [vmem:[%s352 + $0x5c] sm:$0xf]
        %v430 = vld [vmem:[%s352 + $0x60] sm:$0xf]
        %v431 = vld [vmem:[%s352 + $0x64] sm:$0xf]
        %v432 = vld [vmem:[%s352 + $0x68] sm:$0xf]
        %v433 = vld [vmem:[%s352 + $0x6c] sm:$0xf]
        %v434 = vld [vmem:[%s352 + $0x70] sm:$0xf]
        %v435 = vld [vmem:[%s352 + $0x74] sm:$0xf]
        %v436 = vld [vmem:[%s352 + $0x78] sm:$0xf]
        %v437 = vld [vmem:[%s352 + $0x7c] sm:$0xf]
        %v470 = vunpack.c.l.b16 %v406
        %v471 = vunpack.c.l.b16 %v407
        %v472 = vunpack.c.l.b16 %v408
        %v473 = vunpack.c.l.b16 %v409
        %v474 = vunpack.c.l.b16 %v410
        %v475 = vunpack.c.l.b16 %v411
        %v476 = vunpack.c.l.b16 %v412
        %v477 = vunpack.c.l.b16 %v413
        %v478 = vunpack.c.l.b16 %v414
        %v479 = vunpack.c.l.b16 %v415
        %v480 = vunpack.c.l.b16 %v416
        %v481 = vunpack.c.l.b16 %v417
        %v482 = vunpack.c.l.b16 %v418
        %v483 = vunpack.c.l.b16 %v419
        %v484 = vunpack.c.l.b16 %v420
        %v485 = vunpack.c.l.b16 %v421
        %v486 = vunpack.c.l.b16 %v422
        %v487 = vunpack.c.l.b16 %v423
        %v488 = vunpack.c.l.b16 %v424
        %v489 = vunpack.c.l.b16 %v425
        %v490 = vunpack.c.l.b16 %v426
        %v491 = vunpack.c.l.b16 %v427
        %v492 = vunpack.c.l.b16 %v428
        %v493 = vunpack.c.l.b16 %v429
        %v494 = vunpack.c.l.b16 %v430
        %v495 = vunpack.c.l.b16 %v431
        %v496 = vunpack.c.l.b16 %v432
        %v497 = vunpack.c.l.b16 %v433
        %v498 = vunpack.c.l.b16 %v434
        %v499 = vunpack.c.l.b16 %v435
        %v500 = vunpack.c.l.b16 %v436
        %v501 = vunpack.c.l.b16 %v437
        %v502 = vpack.c.b16 %v471, %v470
        %v503 = vpack.c.b16 %v473, %v472
        %v504 = vpack.c.b16 %v475, %v474
        %v505 = vpack.c.b16 %v477, %v476
        %v506 = vpack.c.b16 %v479, %v478
        %v507 = vpack.c.b16 %v481, %v480
        %v508 = vpack.c.b16 %v483, %v482
        %v509 = vpack.c.b16 %v485, %v484
        %v510 = vpack.c.b16 %v487, %v486
        %v511 = vpack.c.b16 %v489, %v488
        %v512 = vpack.c.b16 %v491, %v490
        %v513 = vpack.c.b16 %v493, %v492
        %v514 = vpack.c.b16 %v495, %v494
        %v515 = vpack.c.b16 %v497, %v496
        %v516 = vpack.c.b16 %v499, %v498
        %v517 = vpack.c.b16 %v501, %v500
        %534 = vmatpush.bf16.msra.mxu0 %v509
        %535 = vmatpush.bf16.msra.mxu0 %v508
        %536 = vmatpush.bf16.msra.mxu0 %v507
        %537 = vmatpush.bf16.msra.mxu0 %v506
        %538 = vmatpush.bf16.msra.mxu0 %v505
        %539 = vmatpush.bf16.msra.mxu0 %v504
        %540 = vmatpush.bf16.msra.mxu0 %v503
        %541 = vmatpush.bf16.msra.mxu0 %v502
        %542 = vmatmul.bf16.gmra.mxu0 %v402
        %v543 = vpop.f32.mrf.mxu0
        %v544 = vadd.f32 0.0, %v543
        %v545 = vpop.f32.mrf.mxu0
        %546 = vdwg.mxu0
        %547 = vmatpush.bf16.msra.mxu0 %v517
        %548 = vmatpush.bf16.msra.mxu0 %v516
        %549 = vmatpush.bf16.msra.mxu0 %v515
        %550 = vmatpush.bf16.msra.mxu0 %v514
        %551 = vmatpush.bf16.msra.mxu0 %v513
        %552 = vmatpush.bf16.msra.mxu0 %v512
        %553 = vmatpush.bf16.msra.mxu0 %v511
        %554 = vmatpush.bf16.msra.mxu0 %v510
        %555 = vmatmul.bf16.gmra.mxu0 %v403
        %v556 = vpop.f32.mrf.mxu0
        %v557 = vadd.f32 %v544, %v556
        %v558 = vpop.f32.mrf.mxu0
        %559 = vdwg.mxu0
        %v560 = vstv %s405
        %v561 = vmul.f32 %v560, %v557
        %v562 = vadd.f32 %v404, %v561
        %s563 = sld [smem:[#allocation3 + $0x1]]
        %s564 = scalar_lea.vmem %s352, 128 [#allocation8]
        %v565 = vld [vmem:[%s564] sm:$0xf]
        %v566 = vld [vmem:[%s564 + $0x4] sm:$0xf]
        %v567 = vld [vmem:[%s564 + $0x8] sm:$0xf]
        %v568 = vld [vmem:[%s564 + $0xc] sm:$0xf]
        %v569 = vld [vmem:[%s564 + $0x10] sm:$0xf]
        %v570 = vld [vmem:[%s564 + $0x14] sm:$0xf]
        %v571 = vld [vmem:[%s564 + $0x18] sm:$0xf]
        %v572 = vld [vmem:[%s564 + $0x1c] sm:$0xf]
        %v573 = vld [vmem:[%s564 + $0x20] sm:$0xf]
        %v574 = vld [vmem:[%s564 + $0x24] sm:$0xf]
        %v575 = vld [vmem:[%s564 + $0x28] sm:$0xf]
        %v576 = vld [vmem:[%s564 + $0x2c] sm:$0xf]
        %v577 = vld [vmem:[%s564 + $0x30] sm:$0xf]
        %v578 = vld [vmem:[%s564 + $0x34] sm:$0xf]
        %v579 = vld [vmem:[%s564 + $0x38] sm:$0xf]
        %v580 = vld [vmem:[%s564 + $0x3c] sm:$0xf]
        %v581 = vld [vmem:[%s564 + $0x40] sm:$0xf]
        %v582 = vld [vmem:[%s564 + $0x44] sm:$0xf]
        %v583 = vld [vmem:[%s564 + $0x48] sm:$0xf]
        %v584 = vld [vmem:[%s564 + $0x4c] sm:$0xf]
        %v585 = vld [vmem:[%s564 + $0x50] sm:$0xf]
        %v586 = vld [vmem:[%s564 + $0x54] sm:$0xf]
        %v587 = vld [vmem:[%s564 + $0x58] sm:$0xf]
        %v588 = vld [vmem:[%s564 + $0x5c] sm:$0xf]
        %v589 = vld [vmem:[%s564 + $0x60] sm:$0xf]
        %v590 = vld [vmem:[%s564 + $0x64] sm:$0xf]
        %v591 = vld [vmem:[%s564 + $0x68] sm:$0xf]
        %v592 = vld [vmem:[%s564 + $0x6c] sm:$0xf]
        %v593 = vld [vmem:[%s564 + $0x70] sm:$0xf]
        %v594 = vld [vmem:[%s564 + $0x74] sm:$0xf]
        %v595 = vld [vmem:[%s564 + $0x78] sm:$0xf]
        %v596 = vld [vmem:[%s564 + $0x7c] sm:$0xf]
        %v629 = vunpack.c.l.b16 %v565
        %v630 = vunpack.c.l.b16 %v566
        %v631 = vunpack.c.l.b16 %v567
        %v632 = vunpack.c.l.b16 %v568
        %v633 = vunpack.c.l.b16 %v569
        %v634 = vunpack.c.l.b16 %v570
        %v635 = vunpack.c.l.b16 %v571
        %v636 = vunpack.c.l.b16 %v572
        %v637 = vunpack.c.l.b16 %v573
        %v638 = vunpack.c.l.b16 %v574
        %v639 = vunpack.c.l.b16 %v575
        %v640 = vunpack.c.l.b16 %v576
        %v641 = vunpack.c.l.b16 %v577
        %v642 = vunpack.c.l.b16 %v578
        %v643 = vunpack.c.l.b16 %v579
        %v644 = vunpack.c.l.b16 %v580
        %v645 = vunpack.c.l.b16 %v581
        %v646 = vunpack.c.l.b16 %v582
        %v647 = vunpack.c.l.b16 %v583
        %v648 = vunpack.c.l.b16 %v584
        %v649 = vunpack.c.l.b16 %v585
        %v650 = vunpack.c.l.b16 %v586
        %v651 = vunpack.c.l.b16 %v587
        %v652 = vunpack.c.l.b16 %v588
        %v653 = vunpack.c.l.b16 %v589
        %v654 = vunpack.c.l.b16 %v590
        %v655 = vunpack.c.l.b16 %v591
        %v656 = vunpack.c.l.b16 %v592
        %v657 = vunpack.c.l.b16 %v593
        %v658 = vunpack.c.l.b16 %v594
        %v659 = vunpack.c.l.b16 %v595
        %v660 = vunpack.c.l.b16 %v596
        %v661 = vpack.c.b16 %v630, %v629
        %v662 = vpack.c.b16 %v632, %v631
        %v663 = vpack.c.b16 %v634, %v633
        %v664 = vpack.c.b16 %v636, %v635
        %v665 = vpack.c.b16 %v638, %v637
        %v666 = vpack.c.b16 %v640, %v639
        %v667 = vpack.c.b16 %v642, %v641
        %v668 = vpack.c.b16 %v644, %v643
        %v669 = vpack.c.b16 %v646, %v645
        %v670 = vpack.c.b16 %v648, %v647
        %v671 = vpack.c.b16 %v650, %v649
        %v672 = vpack.c.b16 %v652, %v651
        %v673 = vpack.c.b16 %v654, %v653
        %v674 = vpack.c.b16 %v656, %v655
        %v675 = vpack.c.b16 %v658, %v657
        %v676 = vpack.c.b16 %v660, %v659
        %693 = vmatpush.bf16.msra.mxu0 %v668
        %694 = vmatpush.bf16.msra.mxu0 %v667
        %695 = vmatpush.bf16.msra.mxu0 %v666
        %696 = vmatpush.bf16.msra.mxu0 %v665
        %697 = vmatpush.bf16.msra.mxu0 %v664
        %698 = vmatpush.bf16.msra.mxu0 %v663
        %699 = vmatpush.bf16.msra.mxu0 %v662
        %700 = vmatpush.bf16.msra.mxu0 %v661
        %701 = vmatmul.bf16.gmra.mxu0 %v402
        %v702 = vpop.f32.mrf.mxu0
        %v703 = vadd.f32 0.0, %v702
        %v704 = vpop.f32.mrf.mxu0
        %705 = vdwg.mxu0
        %706 = vmatpush.bf16.msra.mxu0 %v676
        %707 = vmatpush.bf16.msra.mxu0 %v675
        %708 = vmatpush.bf16.msra.mxu0 %v674
        %709 = vmatpush.bf16.msra.mxu0 %v673
        %710 = vmatpush.bf16.msra.mxu0 %v672
        %711 = vmatpush.bf16.msra.mxu0 %v671
        %712 = vmatpush.bf16.msra.mxu0 %v670
        %713 = vmatpush.bf16.msra.mxu0 %v669
        %714 = vmatmul.bf16.gmra.mxu0 %v403
        %v715 = vpop.f32.mrf.mxu0
        %v716 = vadd.f32 %v703, %v715
        %v717 = vpop.f32.mrf.mxu0
        %718 = vdwg.mxu0
        %v719 = vstv %s563
        %v720 = vmul.f32 %v719, %v716
        %v721 = vadd.f32 %v562, %v720
        %s722 = sld [smem:[#allocation3 + $0x2]]
        %s723 = scalar_lea.vmem %s352, 256 [#allocation8]
        %v724 = vld [vmem:[%s723] sm:$0xf]
        %v725 = vld [vmem:[%s723 + $0x4] sm:$0xf]
        %v726 = vld [vmem:[%s723 + $0x8] sm:$0xf]
        %v727 = vld [vmem:[%s723 + $0xc] sm:$0xf]
        %v728 = vld [vmem:[%s723 + $0x10] sm:$0xf]
        %v729 = vld [vmem:[%s723 + $0x14] sm:$0xf]
        %v730 = vld [vmem:[%s723 + $0x18] sm:$0xf]
        %v731 = vld [vmem:[%s723 + $0x1c] sm:$0xf]
        %v732 = vld [vmem:[%s723 + $0x20] sm:$0xf]
        %v733 = vld [vmem:[%s723 + $0x24] sm:$0xf]
        %v734 = vld [vmem:[%s723 + $0x28] sm:$0xf]
        %v735 = vld [vmem:[%s723 + $0x2c] sm:$0xf]
        %v736 = vld [vmem:[%s723 + $0x30] sm:$0xf]
        %v737 = vld [vmem:[%s723 + $0x34] sm:$0xf]
        %v738 = vld [vmem:[%s723 + $0x38] sm:$0xf]
        %v739 = vld [vmem:[%s723 + $0x3c] sm:$0xf]
        %v740 = vld [vmem:[%s723 + $0x40] sm:$0xf]
        %v741 = vld [vmem:[%s723 + $0x44] sm:$0xf]
        %v742 = vld [vmem:[%s723 + $0x48] sm:$0xf]
        %v743 = vld [vmem:[%s723 + $0x4c] sm:$0xf]
        %v744 = vld [vmem:[%s723 + $0x50] sm:$0xf]
        %v745 = vld [vmem:[%s723 + $0x54] sm:$0xf]
        %v746 = vld [vmem:[%s723 + $0x58] sm:$0xf]
        %v747 = vld [vmem:[%s723 + $0x5c] sm:$0xf]
        %v748 = vld [vmem:[%s723 + $0x60] sm:$0xf]
        %v749 = vld [vmem:[%s723 + $0x64] sm:$0xf]
        %v750 = vld [vmem:[%s723 + $0x68] sm:$0xf]
        %v751 = vld [vmem:[%s723 + $0x6c] sm:$0xf]
        %v752 = vld [vmem:[%s723 + $0x70] sm:$0xf]
        %v753 = vld [vmem:[%s723 + $0x74] sm:$0xf]
        %v754 = vld [vmem:[%s723 + $0x78] sm:$0xf]
        %v755 = vld [vmem:[%s723 + $0x7c] sm:$0xf]
        %v788 = vunpack.c.l.b16 %v724
        %v789 = vunpack.c.l.b16 %v725
        %v790 = vunpack.c.l.b16 %v726
        %v791 = vunpack.c.l.b16 %v727
        %v792 = vunpack.c.l.b16 %v728
        %v793 = vunpack.c.l.b16 %v729
        %v794 = vunpack.c.l.b16 %v730
        %v795 = vunpack.c.l.b16 %v731
        %v796 = vunpack.c.l.b16 %v732
        %v797 = vunpack.c.l.b16 %v733
        %v798 = vunpack.c.l.b16 %v734
        %v799 = vunpack.c.l.b16 %v735
        %v800 = vunpack.c.l.b16 %v736
        %v801 = vunpack.c.l.b16 %v737
        %v802 = vunpack.c.l.b16 %v738
        %v803 = vunpack.c.l.b16 %v739
        %v804 = vunpack.c.l.b16 %v740
        %v805 = vunpack.c.l.b16 %v741
        %v806 = vunpack.c.l.b16 %v742
        %v807 = vunpack.c.l.b16 %v743
        %v808 = vunpack.c.l.b16 %v744
        %v809 = vunpack.c.l.b16 %v745
        %v810 = vunpack.c.l.b16 %v746
        %v811 = vunpack.c.l.b16 %v747
        %v812 = vunpack.c.l.b16 %v748
        %v813 = vunpack.c.l.b16 %v749
        %v814 = vunpack.c.l.b16 %v750
        %v815 = vunpack.c.l.b16 %v751
        %v816 = vunpack.c.l.b16 %v752
        %v817 = vunpack.c.l.b16 %v753
        %v818 = vunpack.c.l.b16 %v754
        %v819 = vunpack.c.l.b16 %v755
        %v820 = vpack.c.b16 %v789, %v788
        %v821 = vpack.c.b16 %v791, %v790
        %v822 = vpack.c.b16 %v793, %v792
        %v823 = vpack.c.b16 %v795, %v794
        %v824 = vpack.c.b16 %v797, %v796
        %v825 = vpack.c.b16 %v799, %v798
        %v826 = vpack.c.b16 %v801, %v800
        %v827 = vpack.c.b16 %v803, %v802
        %v828 = vpack.c.b16 %v805, %v804
        %v829 = vpack.c.b16 %v807, %v806
        %v830 = vpack.c.b16 %v809, %v808
        %v831 = vpack.c.b16 %v811, %v810
        %v832 = vpack.c.b16 %v813, %v812
        %v833 = vpack.c.b16 %v815, %v814
        %v834 = vpack.c.b16 %v817, %v816
        %v835 = vpack.c.b16 %v819, %v818
        %852 = vmatpush.bf16.msra.mxu0 %v827
        %853 = vmatpush.bf16.msra.mxu0 %v826
        %854 = vmatpush.bf16.msra.mxu0 %v825
        %855 = vmatpush.bf16.msra.mxu0 %v824
        %856 = vmatpush.bf16.msra.mxu0 %v823
        %857 = vmatpush.bf16.msra.mxu0 %v822
        %858 = vmatpush.bf16.msra.mxu0 %v821
        %859 = vmatpush.bf16.msra.mxu0 %v820
        %860 = vmatmul.bf16.gmra.mxu0 %v402
        %v861 = vpop.f32.mrf.mxu0
        %v862 = vadd.f32 0.0, %v861
        %v863 = vpop.f32.mrf.mxu0
        %864 = vdwg.mxu0
        %865 = vmatpush.bf16.msra.mxu0 %v835
        %866 = vmatpush.bf16.msra.mxu0 %v834
        %867 = vmatpush.bf16.msra.mxu0 %v833
        %868 = vmatpush.bf16.msra.mxu0 %v832
        %869 = vmatpush.bf16.msra.mxu0 %v831
        %870 = vmatpush.bf16.msra.mxu0 %v830
        %871 = vmatpush.bf16.msra.mxu0 %v829
        %872 = vmatpush.bf16.msra.mxu0 %v828
        %873 = vmatmul.bf16.gmra.mxu0 %v403
        %v874 = vpop.f32.mrf.mxu0
        %v875 = vadd.f32 %v862, %v874
        %v876 = vpop.f32.mrf.mxu0
        %877 = vdwg.mxu0
        %v878 = vstv %s722
        %v879 = vmul.f32 %v878, %v875
        %v880 = vadd.f32 %v721, %v879
        %881 = vst [vmem:[#allocation2] sm:$0xff] %v880
        %p882 = scmp.eq.s32.totalorder %s31, 3
        // Predicated region
        $region69: #{tpu_custom_call.1} parent=43 // pred_check
          %p883 = pneg %p882
        $region70: #{tpu_custom_call.1} parent=43 // pred_check_branch
          %885 = sbr.rel (%p883) target = $region72
        $region71: #{tpu_custom_call.1} parent=43 // pred_region
          %s886 = sld [smem:[#allocation3 + $0x80]]
          %v887 = vld [vmem:[#allocation10] sm:$0x1]
          %v888 = vstv %s886
          %v889 = vmul.f32 %v888, %v887
          %s890 = sld [smem:[#allocation3 + $0x81]]
          %s891 = scalar_lea.vmem [#allocation10], 1
          %v892 = vld [vmem:[%s891] sm:$0x1]
          %v893 = vstv %s890
          %v894 = vmul.f32 %v893, %v892
          %v895 = vadd.f32 %v889, %v894
          %s896 = sld [smem:[#allocation3 + $0x82]]
          %s897 = scalar_lea.vmem [#allocation10], 2
          %v898 = vld [vmem:[%s897] sm:$0x1]
          %v899 = vstv %s896
          %v900 = vmul.f32 %v899, %v898
          %v901 = vadd.f32 %v895, %v900
          %v902 = vld [vmem:[#allocation2] sm:$0xff]
          %v904 = vperm.slane %v901, 0
          %v906 = vadd.f32 %v902, %v904
          %v907 = vld [vmem:[#allocation11] sm:$0xff]
          %v908 = vld [vmem:[#allocation11 + $0x8] sm:$0xff]
          %v909 = vld [vmem:[#allocation11 + $0x10] sm:$0xff]
          %v910 = vld [vmem:[#allocation11 + $0x18] sm:$0xff]
          %v911 = vld [vmem:[#allocation11 + $0x20] sm:$0xff]
          %v912 = vld [vmem:[#allocation11 + $0x28] sm:$0xff]
          %v913 = vld [vmem:[#allocation11 + $0x30] sm:$0xff]
          %v914 = vld [vmem:[#allocation11 + $0x38] sm:$0xff]
          %v915 = vld [vmem:[#allocation11 + $0x40] sm:$0xff]
          %v916 = vld [vmem:[#allocation11 + $0x48] sm:$0xff]
          %v917 = vld [vmem:[#allocation11 + $0x50] sm:$0xff]
          %v918 = vld [vmem:[#allocation11 + $0x58] sm:$0xff]
          %v919 = vld [vmem:[#allocation11 + $0x60] sm:$0xff]
          %v920 = vld [vmem:[#allocation11 + $0x68] sm:$0xff]
          %v921 = vld [vmem:[#allocation11 + $0x70] sm:$0xff]
          %v922 = vld [vmem:[#allocation11 + $0x78] sm:$0xff]
          %v923 = vld [vmem:[%s5] sm:$0x1]
          %v925 = vperm.slane %v923, 0
          %927 = vmatpush.msra.mxu0 %v922
          %928 = vmatpush.msra.mxu0 %v921
          %929 = vmatpush.msra.mxu0 %v920
          %930 = vmatpush.msra.mxu0 %v919
          %931 = vmatpush.msra.mxu0 %v918
          %932 = vmatpush.msra.mxu0 %v917
          %933 = vmatpush.msra.mxu0 %v916
          %934 = vmatpush.msra.mxu0 %v915
          %935 = vmatpush.msra.mxu0 %v914
          %936 = vmatpush.msra.mxu0 %v913
          %937 = vmatpush.msra.mxu0 %v912
          %938 = vmatpush.msra.mxu0 %v911
          %939 = vmatpush.msra.mxu0 %v910
          %940 = vmatpush.msra.mxu0 %v909
          %941 = vmatpush.msra.mxu0 %v908
          %942 = vmatpush.msra.mxu0 %v907
          %943 = vmatmul.f32.gmra.mxu0 %v906
          %v944 = vpop.f32.mrf.mxu0
          %v945 = vadd.f32 %v925, %v944
          %946 = vdwg.mxu0
          %947 = vst [vmem:[#allocation13] sm:$0xff] %v945
        $region72: #{tpu_custom_call.1} parent=43 // pred_fallthru
          _
        // Predicated region
        $region73: #{tpu_custom_call.1} parent=43 // pred_check
          %p948 = pneg %p194
        $region74: #{tpu_custom_call.1} parent=43 // pred_check_branch
          %950 = sbr.rel (%p948) target = $region76
        $region75: #{tpu_custom_call.1} parent=43 // pred_region
          %952 = vsyncadd [#allocation5], 0
          %s953 = smul.addr %s30, 8
          %s954 = scalar_lea.hbm %s6, %s953
          %s956 = sshll.u32 [#allocation13], 4
          %s957 = int_to_ptr.vmem [resolvable:$true] %s956
          %s958 = sshll.u32 %s954, 4
          %s959 = int_to_ptr.hbm [resolvable:$true] %s958
          %961 = dma.vmem_to_hbm [thread:$0]  %s957, 128, %s959, [#allocation5]
        $region76: #{tpu_custom_call.1} parent=43 // pred_fallthru
          _
        // Predicated region
        $region77: #{tpu_custom_call.1} parent=43 // pred_check
          %p962 = pneg %p194
        $region78: #{tpu_custom_call.1} parent=43 // pred_check_branch
          %964 = sbr.rel (%p962) target = $region80
        $region79: #{tpu_custom_call.1} parent=43 // pred_region
          %966 = dma.done [#allocation5], 128
        $region80: #{tpu_custom_call.1} parent=43 // pred_fallthru
          _
      $region44: #{tpu_custom_call.1} parent=5 // pred_fallthru
        _
      %p967 = scmp.le.s32.totalorder 2, %s21
      // Predicated region
      $region81: #{tpu_custom_call.1} parent=5 // pred_check
        %p968 = pneg %p967
      $region82: #{tpu_custom_call.1} parent=5 // pred_check_branch
        %970 = sbr.rel (%p968) target = $region84
      $region83: #{tpu_custom_call.1} parent=5 // pred_region
        %s971 = ssub.s32 %s21, 2
      $region84: #{tpu_custom_call.1} parent=5 // pred_fallthru
        _
    $region6: #{tpu_custom_call.1} parent=1 // loop_footer
      %s25 = sadd.s32 1, %s21
    $region7: #{tpu_custom_call.1} parent=1 // loop_footer_branch
      %20 = sbr.rel target = $region3
    $region8: #{tpu_custom_call.1} parent=1 // loop_exit
      _
    %972 = vsyncpa [#allocation4], 1
    %s973 = scalar_lea.sflag [#allocation4], 1
    %974 = vsyncpa %s973, 1
    %975 = vsyncpa [#allocation9], 1
    %s976 = scalar_lea.sflag [#allocation9], 1
    %977 = vsyncpa %s976, 1
    %978 = vsyncpa [#allocation12], 1
    %979 = vsyncpa [#allocation5], 1
    %s980 = scalar_lea.sflag [#allocation5], 1
    %981 = vsyncpa %s980, 1
    %982 = vsyncpa [#allocation6], 1
    %s983 = scalar_lea.sflag [#allocation6], 1
    %984 = vsyncpa %s983, 1

</llo_original>
